<compile_context>
chip_gen: v5e
topology: v5e:2x2
jax: 0.10.0
libtpu: 0.0.40
codegen_flags: <defaults>
</compile_context>

<pallas_src>
import jax
import jax.numpy as jnp
from jax.experimental import pallas as pl
from jax.experimental.pallas import tpu as pltpu


def _round_up(n, m):
    return ((n + m - 1) // m) * m


def _mlp_kernel(x_ref, w1_ref, b1_ref, w2_ref, b2_ref, w3_ref, b3_ref, o_ref):
    """Fused 3-layer MLP on one batch tile (bf16 MXU matmuls, f32 accumulation)."""
    x = x_ref[...].astype(jnp.bfloat16)
    h1 = jnp.dot(x, w1_ref[...], preferred_element_type=jnp.float32) + b1_ref[...]
    h1 = jnp.maximum(h1, 0.0).astype(jnp.bfloat16)
    h2 = jnp.dot(h1, w2_ref[...], preferred_element_type=jnp.float32) + b2_ref[...]
    h2 = jnp.maximum(h2, 0.0).astype(jnp.bfloat16)
    out = jnp.dot(h2, w3_ref[...], preferred_element_type=jnp.float32) + b3_ref[...]
    o_ref[...] = out.astype(o_ref.dtype)


def digit_discriminator_forward(x, params, *, tile_b=None):
    """x: [B, C] float32. params: dict of pre-transposed weights ([in,out]) / biases ([1,out])."""
    B, C = x.shape
    # bf16 weights for the MXU; biases stay f32 (added post-accumulation).
    w1 = params["w1"].astype(jnp.bfloat16)
    w2 = params["w2"].astype(jnp.bfloat16)
    w3 = params["w3"].astype(jnp.bfloat16)
    b1 = params["b1"].astype(jnp.float32)
    b2 = params["b2"].astype(jnp.float32)
    b3 = params["b3"].astype(jnp.float32)
    c2, c4, D = w1.shape[1], w2.shape[1], w3.shape[1]

    # Lane-dense output: zero-pad num_domain up to a multiple of 128 so the
    # final matmul/store is unmasked; extra columns are exact zeros.
    D_pad = _round_up(D, 128)
    if D_pad != D:
        w3 = jnp.pad(w3, ((0, 0), (0, D_pad - D)))
        b3 = jnp.pad(b3, ((0, 0), (0, D_pad - D)))

    # Batch tile: MXU-friendly (up to 256 rows), 8-aligned, small enough that
    # f32 intermediates + resident weights stay inside v7x's 64 MiB VMEM.
    # Batch is padded to a tile multiple instead of asserting divisibility.
    if tile_b is None:
        tile_b = min(256, _round_up(B, 8))
    tile_b = _round_up(tile_b, 8)
    B_pad = _round_up(B, tile_b)
    x_p = jnp.pad(x, ((0, B_pad - B), (0, 0))) if B_pad != B else x
    grid = (B_pad // tile_b,)

    itemsize = lambda a: a.size * a.dtype.itemsize
    flops = 2 * B_pad * (C * c2 + c2 * c4 + c4 * D_pad)
    bytes_accessed = (
        itemsize(x_p)
        + sum(itemsize(a) for a in (w1, b1, w2, b2, w3, b3))
        + B_pad * D_pad * x.dtype.itemsize
    )

    def _call(single_buffer_weights):
        if single_buffer_weights:
            # Constant index_map across the grid -> one VMEM buffer is enough
            # (saves a full second copy of every weight; critical on v7x/v5e).
            resident = lambda a: pl.BlockSpec(
                a.shape, lambda i: (0, 0), pipeline_mode=pl.Buffered(1))
        else:
            resident = lambda a: pl.BlockSpec(a.shape, lambda i: (0, 0))
        return pl.pallas_call(
            _mlp_kernel,
            out_shape=jax.ShapeDtypeStruct((B_pad, D_pad), x.dtype),
            grid_spec=pltpu.PrefetchScalarGridSpec(
                num_scalar_prefetch=0,
                grid=grid,
                in_specs=[
                    pl.BlockSpec((tile_b, C), lambda i: (i, 0)),  # x tile (pipelined)
                    resident(w1), resident(b1),
                    resident(w2), resident(b2),
                    resident(w3), resident(b3),
                ],
                out_specs=pl.BlockSpec((tile_b, D_pad), lambda i: (i, 0)),
            ),
            compiler_params=pltpu.CompilerParams(
                dimension_semantics=("parallel",),
                vmem_limit_bytes=64 * 1024 * 1024,
            ),
            cost_estimate=pl.CostEstimate(
                flops=flops, transcendentals=0, bytes_accessed=bytes_accessed),
        )(x_p, w1, b1, w2, b2, w3, b3)

    try:
        out = _call(True)
    except Exception:
        # Fallback for Pallas versions where BlockSpec pipeline_mode / Buffered(1)
        # is not supported by the TPU pipeliner.
        out = _call(False)

    return out[:B, :D]


def init_params(key, channel, num_domain, dtype=jnp.float32):
    """Deterministic synthetic init matching nn.Linear's fan-in uniform; weights stored [in, out]."""
    ks = jax.random.split(key, 6)
    c2, c4 = channel // 2, channel // 4

    def lin(kw, kb, fan_in, fan_out):
        bound = 1.0 / jnp.sqrt(fan_in)
        w = jax.random.uniform(kw, (fan_in, fan_out), dtype, -bound, bound)
        b = jax.random.uniform(kb, (1, fan_out), dtype, -bound, bound)
        return w, b

    w1, b1 = lin(ks[0], ks[1], channel, c2)
    w2, b2 = lin(ks[2], ks[3], c2, c4)
    w3, b3 = lin(ks[4], ks[5], c4, num_domain)
    return {"w1": w1, "b1": b1, "w2": w2, "b2": b2, "w3": w3, "b3": b3}


def _reference(x, p):
    """Pure-JAX reference mirroring the kernel's bf16-weight / f32-accumulate math."""
    w1 = p["w1"].astype(jnp.bfloat16)
    w2 = p["w2"].astype(jnp.bfloat16)
    w3 = p["w3"].astype(jnp.bfloat16)
    xb = x.astype(jnp.bfloat16)
    h1 = jnp.maximum(jnp.dot(xb, w1, preferred_element_type=jnp.float32) + p["b1"], 0.0)
    h1 = h1.astype(jnp.bfloat16)
    h2 = jnp.maximum(jnp.dot(h1, w2, preferred_element_type=jnp.float32) + p["b2"], 0.0)
    h2 = h2.astype(jnp.bfloat16)
    return jnp.dot(h2, w3, preferred_element_type=jnp.float32) + p["b3"]


if __name__ == "__main__":
    # Small shapes consistent with the module (channel scaled down from 4096).
    batch, channel, num_domain = 8, 256, 3

    key = jax.random.PRNGKey(0)
    kx, kp = jax.random.split(key)
    x = jax.random.normal(kx, (batch, channel), jnp.float32)
    params = init_params(kp, channel, num_domain)

    out = digit_discriminator_forward(x, params)
    out = jax.block_until_ready(out)

    ref = _reference(x, params)
    assert out.shape == (batch, num_domain)
    assert jnp.allclose(out, ref, atol=1e-2, rtol=1e-2), "mismatch vs reference"

    print("KERNEL_OK")
</pallas_src>

<mosaic_0001>
module attributes {stable_mosaic.version = 11 : i64} {
  func.func @_mlp_kernel(%arg0: i32, %arg1: memref<8x256xf32, #tpu.memory_space<vmem>>, %arg2: memref<256x128xbf16, #tpu.memory_space<vmem>>, %arg3: memref<1x128xf32, #tpu.memory_space<vmem>>, %arg4: memref<128x64xbf16, #tpu.memory_space<vmem>>, %arg5: memref<1x64xf32, #tpu.memory_space<vmem>>, %arg6: memref<64x128xbf16, #tpu.memory_space<vmem>>, %arg7: memref<1x128xf32, #tpu.memory_space<vmem>>, %arg8: memref<8x128xf32, #tpu.memory_space<vmem>>) attributes {dimension_semantics = [#tpu.dimension_semantics<parallel>], iteration_bounds = array<i64: 1>, scalar_prefetch = 0 : i64, scratch_operands = 0 : i64, tpu.core_type = #tpu.core_type<tc>, window_params = [{transform_indices = @transform_0, window_bounds = array<i64: 8, 256>}, {pipeline_mode = #tpu.pipeline_mode<synchronous>, transform_indices = @transform_1, window_bounds = array<i64: 256, 128>}, {pipeline_mode = #tpu.pipeline_mode<synchronous>, transform_indices = @transform_2, window_bounds = array<i64: 1, 128>}, {pipeline_mode = #tpu.pipeline_mode<synchronous>, transform_indices = @transform_3, window_bounds = array<i64: 128, 64>}, {pipeline_mode = #tpu.pipeline_mode<synchronous>, transform_indices = @transform_4, window_bounds = array<i64: 1, 64>}, {pipeline_mode = #tpu.pipeline_mode<synchronous>, transform_indices = @transform_5, window_bounds = array<i64: 64, 128>}, {pipeline_mode = #tpu.pipeline_mode<synchronous>, transform_indices = @transform_6, window_bounds = array<i64: 1, 128>}, {transform_indices = @transform_7, window_bounds = array<i64: 8, 128>}]} {
    %c0 = arith.constant 0 : index
    %c0_0 = arith.constant 0 : index
    %0 = vector.load %arg1[%c0, %c0_0] : memref<8x256xf32, #tpu.memory_space<vmem>>, vector<8x256xf32>
    %1 = arith.truncf %0 : vector<8x256xf32> to vector<8x256xbf16>
    %c0_1 = arith.constant 0 : index
    %c0_2 = arith.constant 0 : index
    %2 = vector.load %arg2[%c0_1, %c0_2] : memref<256x128xbf16, #tpu.memory_space<vmem>>, vector<256x128xbf16>
    %cst = arith.constant dense<0.000000e+00> : vector<8x128xf32>
    %3 = tpu.matmul %1, %2, %cst {dimension_numbers = #tpu.dot_dimension_numbers<[1], [0], [0], [1], [0, 0, 1, 1], [], []>} : vector<8x256xbf16>, vector<256x128xbf16>, vector<8x128xf32> -> vector<8x128xf32>
    %c0_3 = arith.constant 0 : index
    %c0_4 = arith.constant 0 : index
    %4 = vector.load %arg3[%c0_3, %c0_4] : memref<1x128xf32, #tpu.memory_space<vmem>>, vector<1x128xf32>
    %5 = vector.broadcast %4 : vector<1x128xf32> to vector<8x128xf32>
    %6 = arith.addf %3, %5 : vector<8x128xf32>
    %cst_5 = arith.constant 0.000000e+00 : f32
    %7 = vector.broadcast %cst_5 : f32 to vector<8x128xf32>
    %8 = arith.maximumf %6, %7 : vector<8x128xf32>
    %9 = arith.truncf %8 : vector<8x128xf32> to vector<8x128xbf16>
    %c0_6 = arith.constant 0 : index
    %c0_7 = arith.constant 0 : index
    %10 = vector.load %arg4[%c0_6, %c0_7] : memref<128x64xbf16, #tpu.memory_space<vmem>>, vector<128x64xbf16>
    %cst_8 = arith.constant dense<0.000000e+00> : vector<8x64xf32>
    %11 = tpu.matmul %9, %10, %cst_8 {dimension_numbers = #tpu.dot_dimension_numbers<[1], [0], [0], [1], [0, 0, 1, 1], [], []>} : vector<8x128xbf16>, vector<128x64xbf16>, vector<8x64xf32> -> vector<8x64xf32>
    %c0_9 = arith.constant 0 : index
    %c0_10 = arith.constant 0 : index
    %12 = vector.load %arg5[%c0_9, %c0_10] : memref<1x64xf32, #tpu.memory_space<vmem>>, vector<1x64xf32>
    %13 = vector.broadcast %12 : vector<1x64xf32> to vector<8x64xf32>
    %14 = arith.addf %11, %13 : vector<8x64xf32>
    %cst_11 = arith.constant 0.000000e+00 : f32
    %15 = vector.broadcast %cst_11 : f32 to vector<8x64xf32>
    %16 = arith.maximumf %14, %15 : vector<8x64xf32>
    %17 = arith.truncf %16 : vector<8x64xf32> to vector<8x64xbf16>
    %c0_12 = arith.constant 0 : index
    %c0_13 = arith.constant 0 : index
    %18 = vector.load %arg6[%c0_12, %c0_13] : memref<64x128xbf16, #tpu.memory_space<vmem>>, vector<64x128xbf16>
    %cst_14 = arith.constant dense<0.000000e+00> : vector<8x128xf32>
    %19 = tpu.matmul %17, %18, %cst_14 {dimension_numbers = #tpu.dot_dimension_numbers<[1], [0], [0], [1], [0, 0, 1, 1], [], []>} : vector<8x64xbf16>, vector<64x128xbf16>, vector<8x128xf32> -> vector<8x128xf32>
    %c0_15 = arith.constant 0 : index
    %c0_16 = arith.constant 0 : index
    %20 = vector.load %arg7[%c0_15, %c0_16] : memref<1x128xf32, #tpu.memory_space<vmem>>, vector<1x128xf32>
    %21 = vector.broadcast %20 : vector<1x128xf32> to vector<8x128xf32>
    %22 = arith.addf %19, %21 : vector<8x128xf32>
    %c0_17 = arith.constant 0 : index
    %c0_18 = arith.constant 0 : index
    %23 = vector.load %arg8[%c0_17, %c0_18] : memref<8x128xf32, #tpu.memory_space<vmem>>, vector<8x128xf32>
    tpu.vector_store %arg8[%c0_17, %c0_18], %22 {strides = array<i32>} : memref<8x128xf32, #tpu.memory_space<vmem>>, vector<8x128xf32>,
    return
  }
  func.func @transform_0(%arg0: i32) -> (i32, i32) {
    %c0_i32 = arith.constant 0 : i32
    %c0_i32_0 = arith.constant 0 : i32
    return %arg0, %c0_i32 : i32, i32
  }
  func.func @transform_1(%arg0: i32) -> (i32, i32) {
    %c0_i32 = arith.constant 0 : i32
    %c0_i32_0 = arith.constant 0 : i32
    %c0_i32_1 = arith.constant 0 : i32
    return %c0_i32, %c0_i32_0 : i32, i32
  }
  func.func @transform_2(%arg0: i32) -> (i32, i32) {
    %c0_i32 = arith.constant 0 : i32
    %c0_i32_0 = arith.constant 0 : i32
    %c0_i32_1 = arith.constant 0 : i32
    return %c0_i32, %c0_i32_0 : i32, i32
  }
  func.func @transform_3(%arg0: i32) -> (i32, i32) {
    %c0_i32 = arith.constant 0 : i32
    %c0_i32_0 = arith.constant 0 : i32
    %c0_i32_1 = arith.constant 0 : i32
    return %c0_i32, %c0_i32_0 : i32, i32
  }
  func.func @transform_4(%arg0: i32) -> (i32, i32) {
    %c0_i32 = arith.constant 0 : i32
    %c0_i32_0 = arith.constant 0 : i32
    %c0_i32_1 = arith.constant 0 : i32
    return %c0_i32, %c0_i32_0 : i32, i32
  }
  func.func @transform_5(%arg0: i32) -> (i32, i32) {
    %c0_i32 = arith.constant 0 : i32
    %c0_i32_0 = arith.constant 0 : i32
    %c0_i32_1 = arith.constant 0 : i32
    return %c0_i32, %c0_i32_0 : i32, i32
  }
  func.func @transform_6(%arg0: i32) -> (i32, i32) {
    %c0_i32 = arith.constant 0 : i32
    %c0_i32_0 = arith.constant 0 : i32
    %c0_i32_1 = arith.constant 0 : i32
    return %c0_i32, %c0_i32_0 : i32, i32
  }
  func.func @transform_7(%arg0: i32) -> (i32, i32) {
    %c0_i32 = arith.constant 0 : i32
    %c0_i32_0 = arith.constant 0 : i32
    return %arg0, %c0_i32 : i32, i32
  }
}

module attributes {stable_mosaic.version = 11 : i64} {
  func.func @_mlp_kernel(%arg0: i32, %arg1: memref<8x256xf32, #tpu.memory_space<vmem>>, %arg2: memref<256x128xbf16, #tpu.memory_space<vmem>>, %arg3: memref<1x128xf32, #tpu.memory_space<vmem>>, %arg4: memref<128x64xbf16, #tpu.memory_space<vmem>>, %arg5: memref<1x64xf32, #tpu.memory_space<vmem>>, %arg6: memref<64x128xbf16, #tpu.memory_space<vmem>>, %arg7: memref<1x128xf32, #tpu.memory_space<vmem>>, %arg8: memref<8x128xf32, #tpu.memory_space<vmem>>) attributes {dimension_semantics = [#tpu.dimension_semantics<parallel>], iteration_bounds = array<i64: 1>, scalar_prefetch = 0 : i64, scratch_operands = 0 : i64, tpu.core_type = #tpu.core_type<tc>, window_params = [{transform_indices = @transform_0, window_bounds = array<i64: 8, 256>}, {pipeline_mode = #tpu.pipeline_mode<synchronous>, transform_indices = @transform_1, window_bounds = array<i64: 256, 128>}, {pipeline_mode = #tpu.pipeline_mode<synchronous>, transform_indices = @transform_2, window_bounds = array<i64: 1, 128>}, {pipeline_mode = #tpu.pipeline_mode<synchronous>, transform_indices = @transform_3, window_bounds = array<i64: 128, 64>}, {pipeline_mode = #tpu.pipeline_mode<synchronous>, transform_indices = @transform_4, window_bounds = array<i64: 1, 64>}, {pipeline_mode = #tpu.pipeline_mode<synchronous>, transform_indices = @transform_5, window_bounds = array<i64: 64, 128>}, {pipeline_mode = #tpu.pipeline_mode<synchronous>, transform_indices = @transform_6, window_bounds = array<i64: 1, 128>}, {transform_indices = @transform_7, window_bounds = array<i64: 8, 128>}]} {
    %c0 = arith.constant 0 : index
    %c0_0 = arith.constant 0 : index
    %0 = vector.load %arg1[%c0, %c0_0] : memref<8x256xf32, #tpu.memory_space<vmem>>, vector<8x256xf32>
    %1 = arith.truncf %0 : vector<8x256xf32> to vector<8x256xbf16>
    %c0_1 = arith.constant 0 : index
    %c0_2 = arith.constant 0 : index
    %2 = vector.load %arg2[%c0_1, %c0_2] : memref<256x128xbf16, #tpu.memory_space<vmem>>, vector<256x128xbf16>
    %cst = arith.constant dense<0.000000e+00> : vector<8x128xf32>
    %3 = tpu.matmul %1, %2, %cst {dimension_numbers = #tpu.dot_dimension_numbers<[1], [0], [0], [1], [0, 0, 1, 1], [], []>} : vector<8x256xbf16>, vector<256x128xbf16>, vector<8x128xf32> -> vector<8x128xf32>
    %c0_3 = arith.constant 0 : index
    %c0_4 = arith.constant 0 : index
    %4 = vector.load %arg3[%c0_3, %c0_4] : memref<1x128xf32, #tpu.memory_space<vmem>>, vector<1x128xf32>
    %5 = vector.broadcast %4 : vector<1x128xf32> to vector<8x128xf32>
    %6 = arith.addf %3, %5 : vector<8x128xf32>
    %cst_5 = arith.constant 0.000000e+00 : f32
    %7 = vector.broadcast %cst_5 : f32 to vector<8x128xf32>
    %8 = arith.maximumf %6, %7 : vector<8x128xf32>
    %9 = arith.truncf %8 : vector<8x128xf32> to vector<8x128xbf16>
    %c0_6 = arith.constant 0 : index
    %c0_7 = arith.constant 0 : index
    %10 = vector.load %arg4[%c0_6, %c0_7] : memref<128x64xbf16, #tpu.memory_space<vmem>>, vector<128x64xbf16>
    %cst_8 = arith.constant dense<0.000000e+00> : vector<8x64xf32>
    %11 = tpu.matmul %9, %10, %cst_8 {dimension_numbers = #tpu.dot_dimension_numbers<[1], [0], [0], [1], [0, 0, 1, 1], [], []>} : vector<8x128xbf16>, vector<128x64xbf16>, vector<8x64xf32> -> vector<8x64xf32>
    %c0_9 = arith.constant 0 : index
    %c0_10 = arith.constant 0 : index
    %12 = vector.load %arg5[%c0_9, %c0_10] : memref<1x64xf32, #tpu.memory_space<vmem>>, vector<1x64xf32>
    %13 = vector.broadcast %12 : vector<1x64xf32> to vector<8x64xf32>
    %14 = arith.addf %11, %13 : vector<8x64xf32>
    %cst_11 = arith.constant 0.000000e+00 : f32
    %15 = vector.broadcast %cst_11 : f32 to vector<8x64xf32>
    %16 = arith.maximumf %14, %15 : vector<8x64xf32>
    %17 = arith.truncf %16 : vector<8x64xf32> to vector<8x64xbf16>
    %c0_12 = arith.constant 0 : index
    %c0_13 = arith.constant 0 : index
    %18 = vector.load %arg6[%c0_12, %c0_13] : memref<64x128xbf16, #tpu.memory_space<vmem>>, vector<64x128xbf16>
    %cst_14 = arith.constant dense<0.000000e+00> : vector<8x128xf32>
    %19 = tpu.matmul %17, %18, %cst_14 {dimension_numbers = #tpu.dot_dimension_numbers<[1], [0], [0], [1], [0, 0, 1, 1], [], []>} : vector<8x64xbf16>, vector<64x128xbf16>, vector<8x128xf32> -> vector<8x128xf32>
    %c0_15 = arith.constant 0 : index
    %c0_16 = arith.constant 0 : index
    %20 = vector.load %arg7[%c0_15, %c0_16] : memref<1x128xf32, #tpu.memory_space<vmem>>, vector<1x128xf32>
    %21 = vector.broadcast %20 : vector<1x128xf32> to vector<8x128xf32>
    %22 = arith.addf %19, %21 : vector<8x128xf32>
    %c0_17 = arith.constant 0 : index
    %c0_18 = arith.constant 0 : index
    %23 = vector.load %arg8[%c0_17, %c0_18] : memref<8x128xf32, #tpu.memory_space<vmem>>, vector<8x128xf32>
    tpu.vector_store %arg8[%c0_17, %c0_18], %22 {strides = array<i32>} : memref<8x128xf32, #tpu.memory_space<vmem>>, vector<8x128xf32>,
    return
  }
  func.func @transform_0(%arg0: i32) -> (i32, i32) {
    %c0_i32 = arith.constant 0 : i32
    %c0_i32_0 = arith.constant 0 : i32
    return %arg0, %c0_i32 : i32, i32
  }
  func.func @transform_1(%arg0: i32) -> (i32, i32) {
    %c0_i32 = arith.constant 0 : i32
    %c0_i32_0 = arith.constant 0 : i32
    %c0_i32_1 = arith.constant 0 : i32
    return %c0_i32, %c0_i32_0 : i32, i32
  }
  func.func @transform_2(%arg0: i32) -> (i32, i32) {
    %c0_i32 = arith.constant 0 : i32
    %c0_i32_0 = arith.constant 0 : i32
    %c0_i32_1 = arith.constant 0 : i32
    return %c0_i32, %c0_i32_0 : i32, i32
  }
  func.func @transform_3(%arg0: i32) -> (i32, i32) {
    %c0_i32 = arith.constant 0 : i32
    %c0_i32_0 = arith.constant 0 : i32
    %c0_i32_1 = arith.constant 0 : i32
    return %c0_i32, %c0_i32_0 : i32, i32
  }
  func.func @transform_4(%arg0: i32) -> (i32, i32) {
    %c0_i32 = arith.constant 0 : i32
    %c0_i32_0 = arith.constant 0 : i32
    %c0_i32_1 = arith.constant 0 : i32
    return %c0_i32, %c0_i32_0 : i32, i32
  }
  func.func @transform_5(%arg0: i32) -> (i32, i32) {
    %c0_i32 = arith.constant 0 : i32
    %c0_i32_0 = arith.constant 0 : i32
    %c0_i32_1 = arith.constant 0 : i32
    return %c0_i32, %c0_i32_0 : i32, i32
  }
  func.func @transform_6(%arg0: i32) -> (i32, i32) {
    %c0_i32 = arith.constant 0 : i32
    %c0_i32_0 = arith.constant 0 : i32
    %c0_i32_1 = arith.constant 0 : i32
    return %c0_i32, %c0_i32_0 : i32, i32
  }
  func.func @transform_7(%arg0: i32) -> (i32, i32) {
    %c0_i32 = arith.constant 0 : i32
    %c0_i32_0 = arith.constant 0 : i32
    return %arg0, %c0_i32 : i32, i32
  }
}

</mosaic_0001>

<llo_original>
// kernel: tpu_custom_call.1
$region0: #{tpu_custom_call.1}
  #allocation0 [shape = 'u32[]', space=smem, size = 0x4, offset = 0x4, fixed_abs, tag = 'smem constant byte address 0x4 - core index']
  #allocation1 [shape = 'u32[72,128]{1,0:T(1,128)}', space=vmem, size = 0x9000, scoped, tag = 'internal scratch']
  %s0 = inlined_call_operand.vmem [shape: f32[8,256], index: 0, kind: input, shape index: {}]
  %s1 = inlined_call_operand.hbm [shape: bf16[256,128], index: 1, kind: input, shape index: {}]
  %s2 = inlined_call_operand.vmem [shape: f32[1,128], index: 2, kind: input, shape index: {}]
  %s3 = inlined_call_operand.vmem [shape: bf16[128,64], index: 3, kind: input, shape index: {}]
  %s4 = inlined_call_operand.vmem [shape: f32[1,64], index: 4, kind: input, shape index: {}]
  %s5 = inlined_call_operand.vmem [shape: bf16[64,128], index: 5, kind: input, shape index: {}]
  %s6 = inlined_call_operand.vmem [shape: f32[1,128], index: 6, kind: input, shape index: {}]
  %s7 = inlined_call_operand.hbm [shape: f32[8,128], index: 7, kind: output, shape index: {}]
  %s8 = sld [smem:[#allocation0]]
  $region42: #{tpu_custom_call.1} parent=0
    _
  %s10 = ssub.s32 1, %s8
  %s11 = scalar_select 0, %s10, %s8
  $region1: #{tpu_custom_call.1} parent=0
    #allocation2 [shape = 'u8[65536]{0}', space=vmem, size = 0x10000, scoped, tag = 'input window, operand 1, single buffered']
    #allocation3 [shape = 's32[1]{0}', space=sflag, size = 0x4, scoped, tag = 'scoped memory for tpu_custom_call.1']
    #allocation4 [shape = 's32[1]{0}', space=sflag, size = 0x4, scoped, tag = 'scoped memory for tpu_custom_call.1']
    #allocation5 [shape = 'u8[4096]{0}', space=vmem, size = 0x1000, scoped, tag = 'output window, operand 0, single buffered']
    %12 = vsyncpa [#allocation3], 0
    %13 = vsyncpa [#allocation4], 0
    // Predicated region
    $region2: #{tpu_custom_call.1} parent=1 // pred_check
      _
    $region3: #{tpu_custom_call.1} parent=1 // pred_check_branch
      %15 = sbr.rel (0) target = $region5
    $region4: #{tpu_custom_call.1} parent=1 // pred_region
      _
    $region5: #{tpu_custom_call.1} parent=1 // pred_fallthru
      _
    // Predicated region
    $region6: #{tpu_custom_call.1} parent=1 // pred_check
      _
    $region7: #{tpu_custom_call.1} parent=1 // pred_check_branch
      %17 = sbr.rel (0) target = $region9
    $region8: #{tpu_custom_call.1} parent=1 // pred_region
      %19 = vsyncadd [#allocation3], 0
      %s20 = sshll.u32 %s1, 4
      %s21 = int_to_ptr.hbm [resolvable:$true] %s20
      %s22 = sshll.u32 [#allocation2], 4
      %s23 = int_to_ptr.vmem [resolvable:$true] %s22
      %28 = dma.hbm_to_vmem [thread:$0]  %s21, 2048, %s23, [#allocation3], 64, 64, 4
    $region9: #{tpu_custom_call.1} parent=1 // pred_fallthru
      _
    // Predicated region
    $region10: #{tpu_custom_call.1} parent=1 // pred_check
      _
    $region11: #{tpu_custom_call.1} parent=1 // pred_check_branch
      %30 = sbr.rel (0) target = $region13
    $region12: #{tpu_custom_call.1} parent=1 // pred_region
      _
    $region13: #{tpu_custom_call.1} parent=1 // pred_fallthru
      _
    // Predicated region
    $region14: #{tpu_custom_call.1} parent=1 // pred_check
      _
    $region15: #{tpu_custom_call.1} parent=1 // pred_check_branch
      %32 = sbr.rel (0) target = $region17
    $region16: #{tpu_custom_call.1} parent=1 // pred_region
      _
    $region17: #{tpu_custom_call.1} parent=1 // pred_fallthru
      _
    // Predicated region
    $region18: #{tpu_custom_call.1} parent=1 // pred_check
      _
    $region19: #{tpu_custom_call.1} parent=1 // pred_check_branch
      %34 = sbr.rel (0) target = $region21
    $region20: #{tpu_custom_call.1} parent=1 // pred_region
      _
    $region21: #{tpu_custom_call.1} parent=1 // pred_fallthru
      _
    // Predicated region
    $region22: #{tpu_custom_call.1} parent=1 // pred_check
      _
    $region23: #{tpu_custom_call.1} parent=1 // pred_check_branch
      %36 = sbr.rel (0) target = $region25
    $region24: #{tpu_custom_call.1} parent=1 // pred_region
      _
    $region25: #{tpu_custom_call.1} parent=1 // pred_fallthru
      _
    // Predicated region
    $region26: #{tpu_custom_call.1} parent=1 // pred_check
      _
    $region27: #{tpu_custom_call.1} parent=1 // pred_check_branch
      %38 = sbr.rel (0) target = $region29
    $region28: #{tpu_custom_call.1} parent=1 // pred_region
      _
    $region29: #{tpu_custom_call.1} parent=1 // pred_fallthru
      _
    // Predicated region
    $region30: #{tpu_custom_call.1} parent=1 // pred_check
      _
    $region31: #{tpu_custom_call.1} parent=1 // pred_check_branch
      %40 = sbr.rel (0) target = $region33
    $region32: #{tpu_custom_call.1} parent=1 // pred_region
      %42 = dma.done [#allocation3], 2048
    $region33: #{tpu_custom_call.1} parent=1 // pred_fallthru
      _
    %v44 = vld [vmem:[%s0] sm:$0xff]
    %v45 = vld [vmem:[%s0 + $0x8] sm:$0xff]
    %v46 = vpack.c.bf16 %v44, %v44
    %v47 = vpack.c.bf16 %v45, %v45
    %v48 = vld [vmem:[#allocation2] sm:$0xf]
    %v49 = vld [vmem:[#allocation2 + $0x4] sm:$0xf]
    %v50 = vld [vmem:[#allocation2 + $0x8] sm:$0xf]
    %v51 = vld [vmem:[#allocation2 + $0xc] sm:$0xf]
    %v52 = vld [vmem:[#allocation2 + $0x10] sm:$0xf]
    %v53 = vld [vmem:[#allocation2 + $0x14] sm:$0xf]
    %v54 = vld [vmem:[#allocation2 + $0x18] sm:$0xf]
    %v55 = vld [vmem:[#allocation2 + $0x1c] sm:$0xf]
    %v56 = vld [vmem:[#allocation2 + $0x20] sm:$0xf]
    %v57 = vld [vmem:[#allocation2 + $0x24] sm:$0xf]
    %v58 = vld [vmem:[#allocation2 + $0x28] sm:$0xf]
    %v59 = vld [vmem:[#allocation2 + $0x2c] sm:$0xf]
    %v60 = vld [vmem:[#allocation2 + $0x30] sm:$0xf]
    %v61 = vld [vmem:[#allocation2 + $0x34] sm:$0xf]
    %v62 = vld [vmem:[#allocation2 + $0x38] sm:$0xf]
    %v63 = vld [vmem:[#allocation2 + $0x3c] sm:$0xf]
    %v64 = vld [vmem:[#allocation2 + $0x40] sm:$0xf]
    %v65 = vld [vmem:[#allocation2 + $0x44] sm:$0xf]
    %v66 = vld [vmem:[#allocation2 + $0x48] sm:$0xf]
    %v67 = vld [vmem:[#allocation2 + $0x4c] sm:$0xf]
    %v68 = vld [vmem:[#allocation2 + $0x50] sm:$0xf]
    %v69 = vld [vmem:[#allocation2 + $0x54] sm:$0xf]
    %v70 = vld [vmem:[#allocation2 + $0x58] sm:$0xf]
    %v71 = vld [vmem:[#allocation2 + $0x5c] sm:$0xf]
    %v72 = vld [vmem:[#allocation2 + $0x60] sm:$0xf]
    %v73 = vld [vmem:[#allocation2 + $0x64] sm:$0xf]
    %v74 = vld [vmem:[#allocation2 + $0x68] sm:$0xf]
    %v75 = vld [vmem:[#allocation2 + $0x6c] sm:$0xf]
    %v76 = vld [vmem:[#allocation2 + $0x70] sm:$0xf]
    %v77 = vld [vmem:[#allocation2 + $0x74] sm:$0xf]
    %v78 = vld [vmem:[#allocation2 + $0x78] sm:$0xf]
    %v79 = vld [vmem:[#allocation2 + $0x7c] sm:$0xf]
    %v80 = vld [vmem:[%s2] sm:$0x1]
    %v82 = vperm.slane %v80, 0
    %v116 = vunpack.c.l.b16 %v48
    %v117 = vunpack.c.l.b16 %v49
    %v118 = vunpack.c.l.b16 %v50
    %v119 = vunpack.c.l.b16 %v51
    %v120 = vunpack.c.l.b16 %v52
    %v121 = vunpack.c.l.b16 %v53
    %v122 = vunpack.c.l.b16 %v54
    %v123 = vunpack.c.l.b16 %v55
    %v124 = vunpack.c.l.b16 %v56
    %v125 = vunpack.c.l.b16 %v57
    %v126 = vunpack.c.l.b16 %v58
    %v127 = vunpack.c.l.b16 %v59
    %v128 = vunpack.c.l.b16 %v60
    %v129 = vunpack.c.l.b16 %v61
    %v130 = vunpack.c.l.b16 %v62
    %v131 = vunpack.c.l.b16 %v63
    %v132 = vunpack.c.l.b16 %v64
    %v133 = vunpack.c.l.b16 %v65
    %v134 = vunpack.c.l.b16 %v66
    %v135 = vunpack.c.l.b16 %v67
    %v136 = vunpack.c.l.b16 %v68
    %v137 = vunpack.c.l.b16 %v69
    %v138 = vunpack.c.l.b16 %v70
    %v139 = vunpack.c.l.b16 %v71
    %v140 = vunpack.c.l.b16 %v72
    %v141 = vunpack.c.l.b16 %v73
    %v142 = vunpack.c.l.b16 %v74
    %v143 = vunpack.c.l.b16 %v75
    %v144 = vunpack.c.l.b16 %v76
    %v145 = vunpack.c.l.b16 %v77
    %v146 = vunpack.c.l.b16 %v78
    %v147 = vunpack.c.l.b16 %v79
    %v148 = vpack.c.b16 %v117, %v116
    %v149 = vpack.c.b16 %v119, %v118
    %v150 = vpack.c.b16 %v121, %v120
    %v151 = vpack.c.b16 %v123, %v122
    %v152 = vpack.c.b16 %v125, %v124
    %v153 = vpack.c.b16 %v127, %v126
    %v154 = vpack.c.b16 %v129, %v128
    %v155 = vpack.c.b16 %v131, %v130
    %v156 = vpack.c.b16 %v133, %v132
    %v157 = vpack.c.b16 %v135, %v134
    %v158 = vpack.c.b16 %v137, %v136
    %v159 = vpack.c.b16 %v139, %v138
    %v160 = vpack.c.b16 %v141, %v140
    %v161 = vpack.c.b16 %v143, %v142
    %v162 = vpack.c.b16 %v145, %v144
    %v163 = vpack.c.b16 %v147, %v146
    %180 = vmatpush.bf16.msra.mxu0 %v155
    %181 = vmatpush.bf16.msra.mxu0 %v154
    %182 = vmatpush.bf16.msra.mxu0 %v153
    %183 = vmatpush.bf16.msra.mxu0 %v152
    %184 = vmatpush.bf16.msra.mxu0 %v151
    %185 = vmatpush.bf16.msra.mxu0 %v150
    %186 = vmatpush.bf16.msra.mxu0 %v149
    %187 = vmatpush.bf16.msra.mxu0 %v148
    %188 = vmatmul.bf16.gmra.mxu0 %v46
    %v189 = vpop.f32.mrf.mxu0
    %v190 = vadd.f32 %v82, %v189
    %v191 = vpop.f32.mrf.mxu0
    %192 = vdwg.mxu0
    %193 = vmatpush.bf16.msra.mxu0 %v163
    %194 = vmatpush.bf16.msra.mxu0 %v162
    %195 = vmatpush.bf16.msra.mxu0 %v161
    %196 = vmatpush.bf16.msra.mxu0 %v160
    %197 = vmatpush.bf16.msra.mxu0 %v159
    %198 = vmatpush.bf16.msra.mxu0 %v158
    %199 = vmatpush.bf16.msra.mxu0 %v157
    %200 = vmatpush.bf16.msra.mxu0 %v156
    %201 = vmatmul.bf16.gmra.mxu0 %v47
    %v202 = vpop.f32.mrf.mxu0
    %v203 = vadd.f32 %v190, %v202
    %v204 = vpop.f32.mrf.mxu0
    %205 = vdwg.mxu0
    %v206 = vmax.f32 %v203, 0.0
    %v207 = vpack.c.bf16 %v206, %v206
    %v208 = vld [vmem:[%s3] sm:$0xf]
    %v209 = vld [vmem:[%s3 + $0x4] sm:$0xf]
    %v210 = vld [vmem:[%s3 + $0x8] sm:$0xf]
    %v211 = vld [vmem:[%s3 + $0xc] sm:$0xf]
    %v212 = vld [vmem:[%s3 + $0x10] sm:$0xf]
    %v213 = vld [vmem:[%s3 + $0x14] sm:$0xf]
    %v214 = vld [vmem:[%s3 + $0x18] sm:$0xf]
    %v215 = vld [vmem:[%s3 + $0x1c] sm:$0xf]
    %v216 = vld [vmem:[%s3 + $0x20] sm:$0xf]
    %v217 = vld [vmem:[%s3 + $0x24] sm:$0xf]
    %v218 = vld [vmem:[%s3 + $0x28] sm:$0xf]
    %v219 = vld [vmem:[%s3 + $0x2c] sm:$0xf]
    %v220 = vld [vmem:[%s3 + $0x30] sm:$0xf]
    %v221 = vld [vmem:[%s3 + $0x34] sm:$0xf]
    %v222 = vld [vmem:[%s3 + $0x38] sm:$0xf]
    %v223 = vld [vmem:[%s3 + $0x3c] sm:$0xf]
    %v224 = vld [vmem:[%s4] sm:$0x1]
    %v226 = vperm.slane %v224, 0
    %v244 = vunpack.c.l.b16 %v208
    %v245 = vunpack.c.l.b16 %v209
    %v246 = vunpack.c.l.b16 %v210
    %v247 = vunpack.c.l.b16 %v211
    %v248 = vunpack.c.l.b16 %v212
    %v249 = vunpack.c.l.b16 %v213
    %v250 = vunpack.c.l.b16 %v214
    %v251 = vunpack.c.l.b16 %v215
    %v252 = vunpack.c.l.b16 %v216
    %v253 = vunpack.c.l.b16 %v217
    %v254 = vunpack.c.l.b16 %v218
    %v255 = vunpack.c.l.b16 %v219
    %v256 = vunpack.c.l.b16 %v220
    %v257 = vunpack.c.l.b16 %v221
    %v258 = vunpack.c.l.b16 %v222
    %v259 = vunpack.c.l.b16 %v223
    %v260 = vpack.c.b16 %v245, %v244
    %v261 = vpack.c.b16 %v247, %v246
    %v262 = vpack.c.b16 %v249, %v248
    %v263 = vpack.c.b16 %v251, %v250
    %v264 = vpack.c.b16 %v253, %v252
    %v265 = vpack.c.b16 %v255, %v254
    %v266 = vpack.c.b16 %v257, %v256
    %v267 = vpack.c.b16 %v259, %v258
    %276 = vmatpush.bf16.msra.mxu0 %v267
    %277 = vmatpush.bf16.msra.mxu0 %v266
    %278 = vmatpush.bf16.msra.mxu0 %v265
    %279 = vmatpush.bf16.msra.mxu0 %v264
    %280 = vmatpush.bf16.msra.mxu0 %v263
    %281 = vmatpush.bf16.msra.mxu0 %v262
    %282 = vmatpush.bf16.msra.mxu0 %v261
    %283 = vmatpush.bf16.msra.mxu0 %v260
    %284 = vmatmul.bf16.gmra.mxu0 %v207
    %v285 = vpop.f32.mrf.mxu0
    %v286 = vadd.f32 %v226, %v285
    %v287 = vpop.f32.mrf.mxu0
    %288 = vdwg.mxu0
    %v289 = vmax.f32 %v286, 0.0
    %v290 = vpack.c.bf16 %v289, %v289
    %v291 = vld [vmem:[%s5] sm:$0xf]
    %v292 = vld [vmem:[%s5 + $0x4] sm:$0xf]
    %v293 = vld [vmem:[%s5 + $0x8] sm:$0xf]
    %v294 = vld [vmem:[%s5 + $0xc] sm:$0xf]
    %v295 = vld [vmem:[%s5 + $0x10] sm:$0xf]
    %v296 = vld [vmem:[%s5 + $0x14] sm:$0xf]
    %v297 = vld [vmem:[%s5 + $0x18] sm:$0xf]
    %v298 = vld [vmem:[%s5 + $0x1c] sm:$0xf]
    %v299 = vld [vmem:[%s6] sm:$0x1]
    %v301 = vperm.slane %v299, 0
    %v311 = vunpack.c.l.b16 %v291
    %v312 = vunpack.c.l.b16 %v292
    %v313 = vunpack.c.l.b16 %v293
    %v314 = vunpack.c.l.b16 %v294
    %v315 = vunpack.c.l.b16 %v295
    %v316 = vunpack.c.l.b16 %v296
    %v317 = vunpack.c.l.b16 %v297
    %v318 = vunpack.c.l.b16 %v298
    %v319 = vpack.c.b16 %v312, %v311
    %v320 = vpack.c.b16 %v314, %v313
    %v321 = vpack.c.b16 %v316, %v315
    %v322 = vpack.c.b16 %v318, %v317
    %vm327 = vcmask 523264
    %v329 = vsel %vm327, %v290, 0
    %331 = vmatpush.bf16.msra.mxu0 0
    %332 = vmatpush.bf16.msra.mxu0 0
    %333 = vmatpush.bf16.msra.mxu0 0
    %334 = vmatpush.bf16.msra.mxu0 0
    %335 = vmatpush.bf16.msra.mxu0 %v322
    %336 = vmatpush.bf16.msra.mxu0 %v321
    %337 = vmatpush.bf16.msra.mxu0 %v320
    %338 = vmatpush.bf16.msra.mxu0 %v319
    %339 = vmatmul.bf16.gmra.mxu0 %v329
    %v340 = vpop.f32.mrf.mxu0
    %v341 = vadd.f32 %v301, %v340
    %v342 = vpop.f32.mrf.mxu0
    %343 = vdwg.mxu0
    %344 = vst [vmem:[#allocation5] sm:$0xff] %v341
    // Predicated region
    $region34: #{tpu_custom_call.1} parent=1 // pred_check
      _
    $region35: #{tpu_custom_call.1} parent=1 // pred_check_branch
      %346 = sbr.rel (0) target = $region37
    $region36: #{tpu_custom_call.1} parent=1 // pred_region
      %348 = vsyncadd [#allocation4], 0
      %s350 = sshll.u32 [#allocation5], 4
      %s351 = int_to_ptr.vmem [resolvable:$true] %s350
      %s352 = sshll.u32 %s7, 4
      %s353 = int_to_ptr.hbm [resolvable:$true] %s352
      %355 = dma.vmem_to_hbm [thread:$0]  %s351, 128, %s353, [#allocation4]
    $region37: #{tpu_custom_call.1} parent=1 // pred_fallthru
      _
    // Predicated region
    $region38: #{tpu_custom_call.1} parent=1 // pred_check
      _
    $region39: #{tpu_custom_call.1} parent=1 // pred_check_branch
      %357 = sbr.rel (0) target = $region41
    $region40: #{tpu_custom_call.1} parent=1 // pred_region
      %359 = dma.done [#allocation4], 128
    $region41: #{tpu_custom_call.1} parent=1 // pred_fallthru
      _
    %360 = vsyncpa [#allocation3], 1
    %361 = vsyncpa [#allocation4], 1

// kernel: tpu_custom_call.1
$region0: #{tpu_custom_call.1}
  #allocation0 [shape = 'u32[]', space=smem, size = 0x4, offset = 0x4, fixed_abs, tag = 'smem constant byte address 0x4 - core index']
  #allocation1 [shape = 'u32[72,128]{1,0:T(1,128)}', space=vmem, size = 0x9000, scoped, tag = 'internal scratch']
  %s0 = inlined_call_operand.vmem [shape: f32[8,256], index: 0, kind: input, shape index: {}]
  %s1 = inlined_call_operand.hbm [shape: bf16[256,128], index: 1, kind: input, shape index: {}]
  %s2 = inlined_call_operand.vmem [shape: f32[1,128], index: 2, kind: input, shape index: {}]
  %s3 = inlined_call_operand.vmem [shape: bf16[128,64], index: 3, kind: input, shape index: {}]
  %s4 = inlined_call_operand.vmem [shape: f32[1,64], index: 4, kind: input, shape index: {}]
  %s5 = inlined_call_operand.vmem [shape: bf16[64,128], index: 5, kind: input, shape index: {}]
  %s6 = inlined_call_operand.vmem [shape: f32[1,128], index: 6, kind: input, shape index: {}]
  %s7 = inlined_call_operand.hbm [shape: f32[8,128], index: 7, kind: output, shape index: {}]
  %s8 = sld [smem:[#allocation0]]
  $region42: #{tpu_custom_call.1} parent=0
    _
  %s10 = ssub.s32 1, %s8
  %s11 = scalar_select 0, %s10, %s8
  $region1: #{tpu_custom_call.1} parent=0
    #allocation2 [shape = 'u8[65536]{0}', space=vmem, size = 0x10000, scoped, tag = 'input window, operand 1, single buffered']
    #allocation3 [shape = 's32[1]{0}', space=sflag, size = 0x4, scoped, tag = 'scoped memory for tpu_custom_call.1']
    #allocation4 [shape = 's32[1]{0}', space=sflag, size = 0x4, scoped, tag = 'scoped memory for tpu_custom_call.1']
    #allocation5 [shape = 'u8[4096]{0}', space=vmem, size = 0x1000, scoped, tag = 'output window, operand 0, single buffered']
    %12 = vsyncpa [#allocation3], 0
    %13 = vsyncpa [#allocation4], 0
    // Predicated region
    $region2: #{tpu_custom_call.1} parent=1 // pred_check
      _
    $region3: #{tpu_custom_call.1} parent=1 // pred_check_branch
      %15 = sbr.rel (0) target = $region5
    $region4: #{tpu_custom_call.1} parent=1 // pred_region
      _
    $region5: #{tpu_custom_call.1} parent=1 // pred_fallthru
      _
    // Predicated region
    $region6: #{tpu_custom_call.1} parent=1 // pred_check
      _
    $region7: #{tpu_custom_call.1} parent=1 // pred_check_branch
      %17 = sbr.rel (0) target = $region9
    $region8: #{tpu_custom_call.1} parent=1 // pred_region
      %19 = vsyncadd [#allocation3], 0
      %s20 = sshll.u32 %s1, 4
      %s21 = int_to_ptr.hbm [resolvable:$true] %s20
      %s22 = sshll.u32 [#allocation2], 4
      %s23 = int_to_ptr.vmem [resolvable:$true] %s22
      %28 = dma.hbm_to_vmem [thread:$0]  %s21, 2048, %s23, [#allocation3], 64, 64, 4
    $region9: #{tpu_custom_call.1} parent=1 // pred_fallthru
      _
    // Predicated region
    $region10: #{tpu_custom_call.1} parent=1 // pred_check
      _
    $region11: #{tpu_custom_call.1} parent=1 // pred_check_branch
      %30 = sbr.rel (0) target = $region13
    $region12: #{tpu_custom_call.1} parent=1 // pred_region
      _
    $region13: #{tpu_custom_call.1} parent=1 // pred_fallthru
      _
    // Predicated region
    $region14: #{tpu_custom_call.1} parent=1 // pred_check
      _
    $region15: #{tpu_custom_call.1} parent=1 // pred_check_branch
      %32 = sbr.rel (0) target = $region17
    $region16: #{tpu_custom_call.1} parent=1 // pred_region
      _
    $region17: #{tpu_custom_call.1} parent=1 // pred_fallthru
      _
    // Predicated region
    $region18: #{tpu_custom_call.1} parent=1 // pred_check
      _
    $region19: #{tpu_custom_call.1} parent=1 // pred_check_branch
      %34 = sbr.rel (0) target = $region21
    $region20: #{tpu_custom_call.1} parent=1 // pred_region
      _
    $region21: #{tpu_custom_call.1} parent=1 // pred_fallthru
      _
    // Predicated region
    $region22: #{tpu_custom_call.1} parent=1 // pred_check
      _
    $region23: #{tpu_custom_call.1} parent=1 // pred_check_branch
      %36 = sbr.rel (0) target = $region25
    $region24: #{tpu_custom_call.1} parent=1 // pred_region
      _
    $region25: #{tpu_custom_call.1} parent=1 // pred_fallthru
      _
    // Predicated region
    $region26: #{tpu_custom_call.1} parent=1 // pred_check
      _
    $region27: #{tpu_custom_call.1} parent=1 // pred_check_branch
      %38 = sbr.rel (0) target = $region29
    $region28: #{tpu_custom_call.1} parent=1 // pred_region
      _
    $region29: #{tpu_custom_call.1} parent=1 // pred_fallthru
      _
    // Predicated region
    $region30: #{tpu_custom_call.1} parent=1 // pred_check
      _
    $region31: #{tpu_custom_call.1} parent=1 // pred_check_branch
      %40 = sbr.rel (0) target = $region33
    $region32: #{tpu_custom_call.1} parent=1 // pred_region
      %42 = dma.done [#allocation3], 2048
    $region33: #{tpu_custom_call.1} parent=1 // pred_fallthru
      _
    %v44 = vld [vmem:[%s0] sm:$0xff]
    %v45 = vld [vmem:[%s0 + $0x8] sm:$0xff]
    %v46 = vpack.c.bf16 %v44, %v44
    %v47 = vpack.c.bf16 %v45, %v45
    %v48 = vld [vmem:[#allocation2] sm:$0xf]
    %v49 = vld [vmem:[#allocation2 + $0x4] sm:$0xf]
    %v50 = vld [vmem:[#allocation2 + $0x8] sm:$0xf]
    %v51 = vld [vmem:[#allocation2 + $0xc] sm:$0xf]
    %v52 = vld [vmem:[#allocation2 + $0x10] sm:$0xf]
    %v53 = vld [vmem:[#allocation2 + $0x14] sm:$0xf]
    %v54 = vld [vmem:[#allocation2 + $0x18] sm:$0xf]
    %v55 = vld [vmem:[#allocation2 + $0x1c] sm:$0xf]
    %v56 = vld [vmem:[#allocation2 + $0x20] sm:$0xf]
    %v57 = vld [vmem:[#allocation2 + $0x24] sm:$0xf]
    %v58 = vld [vmem:[#allocation2 + $0x28] sm:$0xf]
    %v59 = vld [vmem:[#allocation2 + $0x2c] sm:$0xf]
    %v60 = vld [vmem:[#allocation2 + $0x30] sm:$0xf]
    %v61 = vld [vmem:[#allocation2 + $0x34] sm:$0xf]
    %v62 = vld [vmem:[#allocation2 + $0x38] sm:$0xf]
    %v63 = vld [vmem:[#allocation2 + $0x3c] sm:$0xf]
    %v64 = vld [vmem:[#allocation2 + $0x40] sm:$0xf]
    %v65 = vld [vmem:[#allocation2 + $0x44] sm:$0xf]
    %v66 = vld [vmem:[#allocation2 + $0x48] sm:$0xf]
    %v67 = vld [vmem:[#allocation2 + $0x4c] sm:$0xf]
    %v68 = vld [vmem:[#allocation2 + $0x50] sm:$0xf]
    %v69 = vld [vmem:[#allocation2 + $0x54] sm:$0xf]
    %v70 = vld [vmem:[#allocation2 + $0x58] sm:$0xf]
    %v71 = vld [vmem:[#allocation2 + $0x5c] sm:$0xf]
    %v72 = vld [vmem:[#allocation2 + $0x60] sm:$0xf]
    %v73 = vld [vmem:[#allocation2 + $0x64] sm:$0xf]
    %v74 = vld [vmem:[#allocation2 + $0x68] sm:$0xf]
    %v75 = vld [vmem:[#allocation2 + $0x6c] sm:$0xf]
    %v76 = vld [vmem:[#allocation2 + $0x70] sm:$0xf]
    %v77 = vld [vmem:[#allocation2 + $0x74] sm:$0xf]
    %v78 = vld [vmem:[#allocation2 + $0x78] sm:$0xf]
    %v79 = vld [vmem:[#allocation2 + $0x7c] sm:$0xf]
    %v80 = vld [vmem:[%s2] sm:$0x1]
    %v82 = vperm.slane %v80, 0
    %v116 = vunpack.c.l.b16 %v48
    %v117 = vunpack.c.l.b16 %v49
    %v118 = vunpack.c.l.b16 %v50
    %v119 = vunpack.c.l.b16 %v51
    %v120 = vunpack.c.l.b16 %v52
    %v121 = vunpack.c.l.b16 %v53
    %v122 = vunpack.c.l.b16 %v54
    %v123 = vunpack.c.l.b16 %v55
    %v124 = vunpack.c.l.b16 %v56
    %v125 = vunpack.c.l.b16 %v57
    %v126 = vunpack.c.l.b16 %v58
    %v127 = vunpack.c.l.b16 %v59
    %v128 = vunpack.c.l.b16 %v60
    %v129 = vunpack.c.l.b16 %v61
    %v130 = vunpack.c.l.b16 %v62
    %v131 = vunpack.c.l.b16 %v63
    %v132 = vunpack.c.l.b16 %v64
    %v133 = vunpack.c.l.b16 %v65
    %v134 = vunpack.c.l.b16 %v66
    %v135 = vunpack.c.l.b16 %v67
    %v136 = vunpack.c.l.b16 %v68
    %v137 = vunpack.c.l.b16 %v69
    %v138 = vunpack.c.l.b16 %v70
    %v139 = vunpack.c.l.b16 %v71
    %v140 = vunpack.c.l.b16 %v72
    %v141 = vunpack.c.l.b16 %v73
    %v142 = vunpack.c.l.b16 %v74
    %v143 = vunpack.c.l.b16 %v75
    %v144 = vunpack.c.l.b16 %v76
    %v145 = vunpack.c.l.b16 %v77
    %v146 = vunpack.c.l.b16 %v78
    %v147 = vunpack.c.l.b16 %v79
    %v148 = vpack.c.b16 %v117, %v116
    %v149 = vpack.c.b16 %v119, %v118
    %v150 = vpack.c.b16 %v121, %v120
    %v151 = vpack.c.b16 %v123, %v122
    %v152 = vpack.c.b16 %v125, %v124
    %v153 = vpack.c.b16 %v127, %v126
    %v154 = vpack.c.b16 %v129, %v128
    %v155 = vpack.c.b16 %v131, %v130
    %v156 = vpack.c.b16 %v133, %v132
    %v157 = vpack.c.b16 %v135, %v134
    %v158 = vpack.c.b16 %v137, %v136
    %v159 = vpack.c.b16 %v139, %v138
    %v160 = vpack.c.b16 %v141, %v140
    %v161 = vpack.c.b16 %v143, %v142
    %v162 = vpack.c.b16 %v145, %v144
    %v163 = vpack.c.b16 %v147, %v146
    %180 = vmatpush.bf16.msra.mxu0 %v155
    %181 = vmatpush.bf16.msra.mxu0 %v154
    %182 = vmatpush.bf16.msra.mxu0 %v153
    %183 = vmatpush.bf16.msra.mxu0 %v152
    %184 = vmatpush.bf16.msra.mxu0 %v151
    %185 = vmatpush.bf16.msra.mxu0 %v150
    %186 = vmatpush.bf16.msra.mxu0 %v149
    %187 = vmatpush.bf16.msra.mxu0 %v148
    %188 = vmatmul.bf16.gmra.mxu0 %v46
    %v189 = vpop.f32.mrf.mxu0
    %v190 = vadd.f32 %v82, %v189
    %v191 = vpop.f32.mrf.mxu0
    %192 = vdwg.mxu0
    %193 = vmatpush.bf16.msra.mxu0 %v163
    %194 = vmatpush.bf16.msra.mxu0 %v162
    %195 = vmatpush.bf16.msra.mxu0 %v161
    %196 = vmatpush.bf16.msra.mxu0 %v160
    %197 = vmatpush.bf16.msra.mxu0 %v159
    %198 = vmatpush.bf16.msra.mxu0 %v158
    %199 = vmatpush.bf16.msra.mxu0 %v157
    %200 = vmatpush.bf16.msra.mxu0 %v156
    %201 = vmatmul.bf16.gmra.mxu0 %v47
    %v202 = vpop.f32.mrf.mxu0
    %v203 = vadd.f32 %v190, %v202
    %v204 = vpop.f32.mrf.mxu0
    %205 = vdwg.mxu0
    %v206 = vmax.f32 %v203, 0.0
    %v207 = vpack.c.bf16 %v206, %v206
    %v208 = vld [vmem:[%s3] sm:$0xf]
    %v209 = vld [vmem:[%s3 + $0x4] sm:$0xf]
    %v210 = vld [vmem:[%s3 + $0x8] sm:$0xf]
    %v211 = vld [vmem:[%s3 + $0xc] sm:$0xf]
    %v212 = vld [vmem:[%s3 + $0x10] sm:$0xf]
    %v213 = vld [vmem:[%s3 + $0x14] sm:$0xf]
    %v214 = vld [vmem:[%s3 + $0x18] sm:$0xf]
    %v215 = vld [vmem:[%s3 + $0x1c] sm:$0xf]
    %v216 = vld [vmem:[%s3 + $0x20] sm:$0xf]
    %v217 = vld [vmem:[%s3 + $0x24] sm:$0xf]
    %v218 = vld [vmem:[%s3 + $0x28] sm:$0xf]
    %v219 = vld [vmem:[%s3 + $0x2c] sm:$0xf]
    %v220 = vld [vmem:[%s3 + $0x30] sm:$0xf]
    %v221 = vld [vmem:[%s3 + $0x34] sm:$0xf]
    %v222 = vld [vmem:[%s3 + $0x38] sm:$0xf]
    %v223 = vld [vmem:[%s3 + $0x3c] sm:$0xf]
    %v224 = vld [vmem:[%s4] sm:$0x1]
    %v226 = vperm.slane %v224, 0
    %v244 = vunpack.c.l.b16 %v208
    %v245 = vunpack.c.l.b16 %v209
    %v246 = vunpack.c.l.b16 %v210
    %v247 = vunpack.c.l.b16 %v211
    %v248 = vunpack.c.l.b16 %v212
    %v249 = vunpack.c.l.b16 %v213
    %v250 = vunpack.c.l.b16 %v214
    %v251 = vunpack.c.l.b16 %v215
    %v252 = vunpack.c.l.b16 %v216
    %v253 = vunpack.c.l.b16 %v217
    %v254 = vunpack.c.l.b16 %v218
    %v255 = vunpack.c.l.b16 %v219
    %v256 = vunpack.c.l.b16 %v220
    %v257 = vunpack.c.l.b16 %v221
    %v258 = vunpack.c.l.b16 %v222
    %v259 = vunpack.c.l.b16 %v223
    %v260 = vpack.c.b16 %v245, %v244
    %v261 = vpack.c.b16 %v247, %v246
    %v262 = vpack.c.b16 %v249, %v248
    %v263 = vpack.c.b16 %v251, %v250
    %v264 = vpack.c.b16 %v253, %v252
    %v265 = vpack.c.b16 %v255, %v254
    %v266 = vpack.c.b16 %v257, %v256
    %v267 = vpack.c.b16 %v259, %v258
    %276 = vmatpush.bf16.msra.mxu0 %v267
    %277 = vmatpush.bf16.msra.mxu0 %v266
    %278 = vmatpush.bf16.msra.mxu0 %v265
    %279 = vmatpush.bf16.msra.mxu0 %v264
    %280 = vmatpush.bf16.msra.mxu0 %v263
    %281 = vmatpush.bf16.msra.mxu0 %v262
    %282 = vmatpush.bf16.msra.mxu0 %v261
    %283 = vmatpush.bf16.msra.mxu0 %v260
    %284 = vmatmul.bf16.gmra.mxu0 %v207
    %v285 = vpop.f32.mrf.mxu0
    %v286 = vadd.f32 %v226, %v285
    %v287 = vpop.f32.mrf.mxu0
    %288 = vdwg.mxu0
    %v289 = vmax.f32 %v286, 0.0
    %v290 = vpack.c.bf16 %v289, %v289
    %v291 = vld [vmem:[%s5] sm:$0xf]
    %v292 = vld [vmem:[%s5 + $0x4] sm:$0xf]
    %v293 = vld [vmem:[%s5 + $0x8] sm:$0xf]
    %v294 = vld [vmem:[%s5 + $0xc] sm:$0xf]
    %v295 = vld [vmem:[%s5 + $0x10] sm:$0xf]
    %v296 = vld [vmem:[%s5 + $0x14] sm:$0xf]
    %v297 = vld [vmem:[%s5 + $0x18] sm:$0xf]
    %v298 = vld [vmem:[%s5 + $0x1c] sm:$0xf]
    %v299 = vld [vmem:[%s6] sm:$0x1]
    %v301 = vperm.slane %v299, 0
    %v311 = vunpack.c.l.b16 %v291
    %v312 = vunpack.c.l.b16 %v292
    %v313 = vunpack.c.l.b16 %v293
    %v314 = vunpack.c.l.b16 %v294
    %v315 = vunpack.c.l.b16 %v295
    %v316 = vunpack.c.l.b16 %v296
    %v317 = vunpack.c.l.b16 %v297
    %v318 = vunpack.c.l.b16 %v298
    %v319 = vpack.c.b16 %v312, %v311
    %v320 = vpack.c.b16 %v314, %v313
    %v321 = vpack.c.b16 %v316, %v315
    %v322 = vpack.c.b16 %v318, %v317
    %vm327 = vcmask 523264
    %v329 = vsel %vm327, %v290, 0
    %331 = vmatpush.bf16.msra.mxu0 0
    %332 = vmatpush.bf16.msra.mxu0 0
    %333 = vmatpush.bf16.msra.mxu0 0
    %334 = vmatpush.bf16.msra.mxu0 0
    %335 = vmatpush.bf16.msra.mxu0 %v322
    %336 = vmatpush.bf16.msra.mxu0 %v321
    %337 = vmatpush.bf16.msra.mxu0 %v320
    %338 = vmatpush.bf16.msra.mxu0 %v319
    %339 = vmatmul.bf16.gmra.mxu0 %v329
    %v340 = vpop.f32.mrf.mxu0
    %v341 = vadd.f32 %v301, %v340
    %v342 = vpop.f32.mrf.mxu0
    %343 = vdwg.mxu0
    %344 = vst [vmem:[#allocation5] sm:$0xff] %v341
    // Predicated region
    $region34: #{tpu_custom_call.1} parent=1 // pred_check
      _
    $region35: #{tpu_custom_call.1} parent=1 // pred_check_branch
      %346 = sbr.rel (0) target = $region37
    $region36: #{tpu_custom_call.1} parent=1 // pred_region
      %348 = vsyncadd [#allocation4], 0
      %s350 = sshll.u32 [#allocation5], 4
      %s351 = int_to_ptr.vmem [resolvable:$true] %s350
      %s352 = sshll.u32 %s7, 4
      %s353 = int_to_ptr.hbm [resolvable:$true] %s352
      %355 = dma.vmem_to_hbm [thread:$0]  %s351, 128, %s353, [#allocation4]
    $region37: #{tpu_custom_call.1} parent=1 // pred_fallthru
      _
    // Predicated region
    $region38: #{tpu_custom_call.1} parent=1 // pred_check
      _
    $region39: #{tpu_custom_call.1} parent=1 // pred_check_branch
      %357 = sbr.rel (0) target = $region41
    $region40: #{tpu_custom_call.1} parent=1 // pred_region
      %359 = dma.done [#allocation4], 128
    $region41: #{tpu_custom_call.1} parent=1 // pred_fallthru
      _
    %360 = vsyncpa [#allocation3], 1
    %361 = vsyncpa [#allocation4], 1

</llo_original>
